<compile_context>
chip_gen: v7x
topology: tpu7x:2x2x1
jax: 0.10.0
libtpu: 0.0.40
codegen_flags: <defaults>
</compile_context>

<pallas_src>
import functools

import jax
import jax.numpy as jnp
import numpy as np
from jax.experimental import pallas as pl
from jax.experimental.pallas import tpu as pltpu


def _build_banded_weight(w_oihw, *, W, Wout, stride, pad_left, lanes):
    """(Cout, Cin, KH, KW) -> (KH*lanes, Wout*Cout) banded conv matrix.

    Row index = kh*lanes + win*Cin + ci   (win = input column, ci = in-channel)
    Col index = wo*Cout + co
    Entry     = w[co, ci, kh, kw]  where  win == wo*stride - pad_left + kw,
    else 0.  Out-of-range win (left/right zero padding) either matches no row
    or hits an always-zero input lane, reproducing ZeroPad2d exactly.
    """
    Cout, Cin, KH, KW = w_oihw.shape
    w_t = jnp.transpose(w_oihw, (2, 3, 1, 0)).astype(jnp.float32)  # (KH,KW,Cin,Cout)
    n_cols = lanes // Cin
    rows = np.arange(n_cols)
    blocks = []
    for kh in range(KH):
        blk = jnp.zeros((n_cols, Cin, Wout, Cout), jnp.float32)
        for kw in range(KW):
            win = np.arange(Wout) * stride - pad_left + kw          # (Wout,)
            sel = jnp.asarray((rows[:, None] == win[None, :]).astype(np.float32))
            blk = blk + sel[:, None, :, None] * w_t[kh, kw][None, :, None, :]
        blocks.append(blk)
    return jnp.stack(blocks, axis=0).reshape(KH * lanes, Wout * Cout)


def _conv_bn_relu6_kernel(x_ref, w2_ref, gamma_ref, beta_ref, o_ref, cols_ref,
                          *, stride, pad_top, kh_taps, lanes, hout, wout, cout,
                          eps):
    """Fused pad + conv (single banded matmul) + BN(batch stats) + ReLU6.

    x_ref:     (N, H, W*Cin)            unpadded input, NHWC with (w,ci) merged
    w2_ref:    (KH*lanes, Wout*Cout)    banded conv weight
    gamma_ref: (1, Wout*Cout)           BN scale, tiled per (wo, co)
    beta_ref:  (1, Wout*Cout)           BN shift, tiled per (wo, co)
    o_ref:     (N, Hout, Wout*Cout)     lane-dense output
    cols_ref:  (N, Hout, KH*lanes)      VMEM im2col scratch
    """
    N, H, WC = x_ref.shape
    KL, PC = w2_ref.shape

    # ---- fused ZeroPad2d + H-axis im2col into a zero-filled VMEM scratch ----
    # (W taps / left-right padding live in the banded weight; lane offsets of
    #  the stores below are 128-aligned, so no masked-lane relayouts.)
    cols_ref[...] = jnp.zeros_like(cols_ref)
    xv = x_ref[...].astype(jnp.float32)                      # (N, H, W*Cin)
    for kh in range(kh_taps):                                # static unroll
        # output row ho reads input row  hin = ho*stride + kh - pad_top
        ho_lo = max(0, -((kh - pad_top) // stride))
        ho_hi = min(hout, (H - 1 - kh + pad_top) // stride + 1)
        if ho_hi <= ho_lo:
            continue
        hin_lo = ho_lo * stride + kh - pad_top
        hin_hi = hin_lo + (ho_hi - ho_lo - 1) * stride + 1
        cols_ref[:, ho_lo:ho_hi, kh * lanes:kh * lanes + WC] = (
            xv[:, hin_lo:hin_hi:stride, :])

    cols = cols_ref[...].reshape(N * hout, KL)               # leading-dim collapse only

    # ---- the entire convolution as ONE MXU matmul ----
    acc = jnp.dot(cols, w2_ref[...],
                  preferred_element_type=jnp.float32)        # (N*Hout, Wout*Cout)

    # ---- BatchNorm2d, training-mode batch statistics (two-pass) + ReLU6 ----
    cnt = jnp.float32(N * hout * wout)

    def per_channel_total(row):
        # (1, PC) column sums -> per-channel totals, replicated across each
        # channel's Wout lanes (channel index = lane % cout): log2 fold on XLU.
        step = PC // 2
        while step >= cout:
            row = row + pltpu.roll(row, step, axis=1)
            step //= 2
        return row

    mean = per_channel_total(jnp.sum(acc, axis=0, keepdims=True)) / cnt
    cen = acc - mean                                         # reused for var + output
    var = per_channel_total(jnp.sum(cen * cen, axis=0, keepdims=True)) / cnt
    scale = jax.lax.rsqrt(var + eps) * gamma_ref[...]        # (1, PC), broadcast
    y = cen * scale + beta_ref[...]
    y = jnp.clip(y, 0.0, 6.0)

    # lane-dense store (last dim = Wout*Cout, a multiple of 128 here)
    o_ref[...] = y.reshape(N, hout, PC).astype(o_ref.dtype)


def conv_bn_relu6(x_nchw, w_oihw, gamma, beta, *, stride=1, eps=1e-5):
    """Matches _conv_bn.forward(x) for NCHW input / OIHW conv weights."""
    N, Cin, H, W = x_nchw.shape
    Cout, Cin_w, KH, KW = w_oihw.shape
    assert Cin_w == Cin

    # nn.ZeroPad2d((0,1,0,1)) if stride==2 else nn.ZeroPad2d(kernel_size // 2)
    if stride == 2:
        pad_l, pad_r, pad_t, pad_b = 0, 1, 0, 1
    else:
        p = KH // 2
        pad_l = pad_r = pad_t = pad_b = p

    Hout = (H + pad_t + pad_b - KH) // stride + 1
    Wout = (W + pad_l + pad_r - KW) // stride + 1
    PC = Wout * Cout
    # The log2 roll-fold BN reduction needs power-of-two lane / channel counts.
    assert (Cout & (Cout - 1)) == 0 and (PC & (PC - 1)) == 0

    WC = W * Cin
    lanes = int(pl.cdiv(WC, 128)) * 128        # pad the (w, ci) lane axis to 128
    assert lanes % Cin == 0

    # NCHW -> (N, H, W*Cin): the reshape is free, the transpose is one tiny XLA
    # op (production: keep activations NHWC end-to-end and drop it).
    x_rows = jnp.transpose(x_nchw, (0, 2, 3, 1)).astype(jnp.float32).reshape(N, H, WC)

    w2 = _build_banded_weight(w_oihw, W=W, Wout=Wout, stride=stride,
                              pad_left=pad_l, lanes=lanes)
    gamma_t = jnp.tile(gamma.astype(jnp.float32).reshape(Cout), (Wout,)).reshape(1, PC)
    beta_t = jnp.tile(beta.astype(jnp.float32).reshape(Cout), (Wout,)).reshape(1, PC)

    kernel = functools.partial(
        _conv_bn_relu6_kernel, stride=stride, pad_top=pad_t, kh_taps=KH,
        lanes=lanes, hout=Hout, wout=Wout, cout=Cout, eps=eps)

    # Tiny problem: one grid step with full-array blocks (everything fits VMEM
    # with large margin).  For production shapes: tile N/Hout ("parallel", so
    # v7x's 2 TensorCores shard it), keep a BN-reduction axis "arbitrary", and
    # budget tiles for 64 MiB VMEM on v7x / >=256-wide MXU operands on v6e.
    out = pl.pallas_call(
        kernel,
        out_shape=jax.ShapeDtypeStruct((N, Hout, PC), jnp.float32),
        grid=(1,),
        in_specs=[
            pl.BlockSpec((N, H, WC), lambda i: (0, 0, 0)),
            pl.BlockSpec((KH * lanes, PC), lambda i: (0, 0)),
            pl.BlockSpec((1, PC), lambda i: (0, 0)),
            pl.BlockSpec((1, PC), lambda i: (0, 0)),
        ],
        out_specs=pl.BlockSpec((N, Hout, PC), lambda i: (0, 0, 0)),
        scratch_shapes=[pltpu.VMEM((N, Hout, KH * lanes), jnp.float32)],
        compiler_params=pltpu.CompilerParams(
            dimension_semantics=("arbitrary",)),
    )(x_rows, w2, gamma_t, beta_t)

    # (N, Hout, Wout*Cout) -> NCHW (reshape is free; one tiny XLA transpose).
    return jnp.transpose(out.reshape(N, Hout, Wout, Cout), (0, 3, 1, 2))


def reference_conv_bn_relu6(x_nchw, w_oihw, gamma, beta, stride, eps=1e-5):
    """Pure-JAX emulation of the PyTorch module (correctness check)."""
    _, _, K, _ = w_oihw.shape
    if stride == 2:
        pads = ((0, 0), (0, 0), (0, 1), (0, 1))
    else:
        p = K // 2
        pads = ((0, 0), (0, 0), (p, p), (p, p))
    xp = jnp.pad(x_nchw, pads)
    y = jax.lax.conv_general_dilated(
        xp, w_oihw, window_strides=(stride, stride), padding="VALID",
        dimension_numbers=("NCHW", "OIHW", "NCHW"))
    mean = jnp.mean(y, axis=(0, 2, 3), keepdims=True)
    var = jnp.mean((y - mean) ** 2, axis=(0, 2, 3), keepdims=True)
    yn = (y - mean) / jnp.sqrt(var + eps)
    yn = yn * gamma.reshape(1, -1, 1, 1) + beta.reshape(1, -1, 1, 1)
    return jnp.clip(yn, 0.0, 6.0)


if __name__ == "__main__":
    key = jax.random.PRNGKey(0)
    k1, k2, k3, k4 = jax.random.split(key, 4)

    # _conv_bn(in_channels=4, out_channels=8, kernel_size=3, stride=1)
    N, Cin, H, W = 2, 4, 16, 16
    Cout, K, stride = 8, 3, 1

    x = jax.random.normal(k1, (N, Cin, H, W), dtype=jnp.float32)
    w = jax.random.normal(k2, (Cout, Cin, K, K), dtype=jnp.float32) * 0.1   # conv.weight (OIHW)
    gamma = jax.random.uniform(k3, (Cout,), jnp.float32, 0.5, 1.5)          # bn.weight
    beta = jax.random.normal(k4, (Cout,), dtype=jnp.float32) * 0.1          # bn.bias

    out = jax.block_until_ready(conv_bn_relu6(x, w, gamma, beta, stride=stride))

    ref = reference_conv_bn_relu6(x, w, gamma, beta, stride)
    assert out.shape == ref.shape, (out.shape, ref.shape)
    np.testing.assert_allclose(np.asarray(out), np.asarray(ref), rtol=1e-2, atol=1e-2)

    print("KERNEL_OK")
</pallas_src>

<mosaic_0001>
module attributes {stable_mosaic.version = 11 : i64} {
  func.func @_conv_bn_relu6_kernel(%arg0: i32, %arg1: memref<2x16x64xf32, #tpu.memory_space<vmem>>, %arg2: memref<384x128xf32, #tpu.memory_space<vmem>>, %arg3: memref<1x128xf32, #tpu.memory_space<vmem>>, %arg4: memref<1x128xf32, #tpu.memory_space<vmem>>, %arg5: memref<2x16x128xf32, #tpu.memory_space<vmem>>, %arg6: memref<2x16x384xf32, #tpu.memory_space<vmem>>) attributes {dimension_semantics = [#tpu.dimension_semantics<arbitrary>], iteration_bounds = array<i64: 1>, scalar_prefetch = 0 : i64, scratch_operands = 1 : i64, tpu.core_type = #tpu.core_type<tc>, window_params = [{pipeline_mode = #tpu.pipeline_mode<synchronous>, transform_indices = @transform_0, window_bounds = array<i64: 2, 16, 64>}, {pipeline_mode = #tpu.pipeline_mode<synchronous>, transform_indices = @transform_1, window_bounds = array<i64: 384, 128>}, {pipeline_mode = #tpu.pipeline_mode<synchronous>, transform_indices = @transform_2, window_bounds = array<i64: 1, 128>}, {pipeline_mode = #tpu.pipeline_mode<synchronous>, transform_indices = @transform_3, window_bounds = array<i64: 1, 128>}, {pipeline_mode = #tpu.pipeline_mode<synchronous>, transform_indices = @transform_4, window_bounds = array<i64: 2, 16, 128>}]} {
    %cst = arith.constant 0.000000e+00 : f32
    %0 = vector.broadcast %cst : f32 to vector<2x16x384xf32>
    %c0 = arith.constant 0 : index
    %c0_0 = arith.constant 0 : index
    %c0_1 = arith.constant 0 : index
    %1 = vector.load %arg6[%c0, %c0_0, %c0_1] : memref<2x16x384xf32, #tpu.memory_space<vmem>>, vector<2x16x384xf32>
    tpu.vector_store %arg6[%c0, %c0_0, %c0_1], %0 {strides = array<i32>} : memref<2x16x384xf32, #tpu.memory_space<vmem>>, vector<2x16x384xf32>,
    %c0_2 = arith.constant 0 : index
    %c0_3 = arith.constant 0 : index
    %c0_4 = arith.constant 0 : index
    %2 = vector.load %arg1[%c0_2, %c0_3, %c0_4] : memref<2x16x64xf32, #tpu.memory_space<vmem>>, vector<2x16x64xf32>
    %3 = vector.extract_strided_slice %2 {offsets = [0, 0, 0], sizes = [2, 15, 64], strides = [1, 1, 1]} : vector<2x16x64xf32> to vector<2x15x64xf32>
    %c0_5 = arith.constant 0 : index
    %c1 = arith.constant 1 : index
    %c0_6 = arith.constant 0 : index
    %4 = vector.load %arg6[%c0_5, %c1, %c0_6] : memref<2x16x384xf32, #tpu.memory_space<vmem>>, vector<2x15x64xf32>
    tpu.vector_store %arg6[%c0_5, %c1, %c0_6], %3 {strides = array<i32>} : memref<2x16x384xf32, #tpu.memory_space<vmem>>, vector<2x15x64xf32>,
    %c0_7 = arith.constant 0 : index
    %c0_8 = arith.constant 0 : index
    %c128 = arith.constant 128 : index
    %5 = vector.load %arg6[%c0_7, %c0_8, %c128] : memref<2x16x384xf32, #tpu.memory_space<vmem>>, vector<2x16x64xf32>
    tpu.vector_store %arg6[%c0_7, %c0_8, %c128], %2 {strides = array<i32>} : memref<2x16x384xf32, #tpu.memory_space<vmem>>, vector<2x16x64xf32>,
    %6 = vector.extract_strided_slice %2 {offsets = [0, 1, 0], sizes = [2, 15, 64], strides = [1, 1, 1]} : vector<2x16x64xf32> to vector<2x15x64xf32>
    %c0_9 = arith.constant 0 : index
    %c0_10 = arith.constant 0 : index
    %c256 = arith.constant 256 : index
    %7 = vector.load %arg6[%c0_9, %c0_10, %c256] : memref<2x16x384xf32, #tpu.memory_space<vmem>>, vector<2x15x64xf32>
    tpu.vector_store %arg6[%c0_9, %c0_10, %c256], %6 {strides = array<i32>} : memref<2x16x384xf32, #tpu.memory_space<vmem>>, vector<2x15x64xf32>,
    %c0_11 = arith.constant 0 : index
    %c0_12 = arith.constant 0 : index
    %c0_13 = arith.constant 0 : index
    %8 = vector.load %arg6[%c0_11, %c0_12, %c0_13] : memref<2x16x384xf32, #tpu.memory_space<vmem>>, vector<2x16x384xf32>
    %9 = vector.shape_cast %8 : vector<2x16x384xf32> to vector<32x384xf32>
    %c0_14 = arith.constant 0 : index
    %c0_15 = arith.constant 0 : index
    %10 = vector.load %arg2[%c0_14, %c0_15] : memref<384x128xf32, #tpu.memory_space<vmem>>, vector<384x128xf32>
    %cst_16 = arith.constant dense<0.000000e+00> : vector<32x128xf32>
    %11 = tpu.matmul %9, %10, %cst_16 {dimension_numbers = #tpu.dot_dimension_numbers<[1], [0], [0], [1], [0, 0, 1, 1], [], []>} : vector<32x384xf32>, vector<384x128xf32>, vector<32x128xf32> -> vector<32x128xf32>
    %cst_17 = arith.constant dense<0.000000e+00> : vector<128xf32>
    %12 = vector.multi_reduction <add>, %11, %cst_17 [0] : vector<32x128xf32> to vector<128xf32>
    %13 = vector.shape_cast %12 : vector<128xf32> to vector<1x128xf32>
    %c64_i32 = arith.constant 64 : i32
    %14 = tpu.dynamic_rotate %13 by %c64_i32 dim 1 : vector<1x128xf32>, i32 -> vector<1x128xf32>
    %15 = arith.addf %13, %14 : vector<1x128xf32>
    %c32_i32 = arith.constant 32 : i32
    %16 = tpu.dynamic_rotate %15 by %c32_i32 dim 1 : vector<1x128xf32>, i32 -> vector<1x128xf32>
    %17 = arith.addf %15, %16 : vector<1x128xf32>
    %c16_i32 = arith.constant 16 : i32
    %18 = tpu.dynamic_rotate %17 by %c16_i32 dim 1 : vector<1x128xf32>, i32 -> vector<1x128xf32>
    %19 = arith.addf %17, %18 : vector<1x128xf32>
    %c8_i32 = arith.constant 8 : i32
    %20 = tpu.dynamic_rotate %19 by %c8_i32 dim 1 : vector<1x128xf32>, i32 -> vector<1x128xf32>
    %21 = arith.addf %19, %20 : vector<1x128xf32>
    %cst_18 = arith.constant 5.120000e+02 : f32
    %22 = vector.broadcast %cst_18 : f32 to vector<1x128xf32>
    %23 = arith.divf %21, %22 : vector<1x128xf32>
    %24 = vector.broadcast %23 : vector<1x128xf32> to vector<32x128xf32>
    %25 = arith.subf %11, %24 : vector<32x128xf32>
    %26 = arith.mulf %25, %25 : vector<32x128xf32>
    %cst_19 = arith.constant dense<0.000000e+00> : vector<128xf32>
    %27 = vector.multi_reduction <add>, %26, %cst_19 [0] : vector<32x128xf32> to vector<128xf32>
    %28 = vector.shape_cast %27 : vector<128xf32> to vector<1x128xf32>
    %c64_i32_20 = arith.constant 64 : i32
    %29 = tpu.dynamic_rotate %28 by %c64_i32_20 dim 1 : vector<1x128xf32>, i32 -> vector<1x128xf32>
    %30 = arith.addf %28, %29 : vector<1x128xf32>
    %c32_i32_21 = arith.constant 32 : i32
    %31 = tpu.dynamic_rotate %30 by %c32_i32_21 dim 1 : vector<1x128xf32>, i32 -> vector<1x128xf32>
    %32 = arith.addf %30, %31 : vector<1x128xf32>
    %c16_i32_22 = arith.constant 16 : i32
    %33 = tpu.dynamic_rotate %32 by %c16_i32_22 dim 1 : vector<1x128xf32>, i32 -> vector<1x128xf32>
    %34 = arith.addf %32, %33 : vector<1x128xf32>
    %c8_i32_23 = arith.constant 8 : i32
    %35 = tpu.dynamic_rotate %34 by %c8_i32_23 dim 1 : vector<1x128xf32>, i32 -> vector<1x128xf32>
    %36 = arith.addf %34, %35 : vector<1x128xf32>
    %cst_24 = arith.constant 5.120000e+02 : f32
    %37 = vector.broadcast %cst_24 : f32 to vector<1x128xf32>
    %38 = arith.divf %36, %37 : vector<1x128xf32>
    %cst_25 = arith.constant 9.99999974E-6 : f32
    %39 = vector.broadcast %cst_25 : f32 to vector<1x128xf32>
    %40 = arith.addf %38, %39 : vector<1x128xf32>
    %41 = math.rsqrt %40 : vector<1x128xf32>
    %c0_26 = arith.constant 0 : index
    %c0_27 = arith.constant 0 : index
    %42 = vector.load %arg3[%c0_26, %c0_27] : memref<1x128xf32, #tpu.memory_space<vmem>>, vector<1x128xf32>
    %43 = arith.mulf %41, %42 : vector<1x128xf32>
    %44 = vector.broadcast %43 : vector<1x128xf32> to vector<32x128xf32>
    %45 = arith.mulf %25, %44 : vector<32x128xf32>
    %c0_28 = arith.constant 0 : index
    %c0_29 = arith.constant 0 : index
    %46 = vector.load %arg4[%c0_28, %c0_29] : memref<1x128xf32, #tpu.memory_space<vmem>>, vector<1x128xf32>
    %47 = vector.broadcast %46 : vector<1x128xf32> to vector<32x128xf32>
    %48 = arith.addf %45, %47 : vector<32x128xf32>
    %cst_30 = arith.constant 0.000000e+00 : f32
    %cst_31 = arith.constant 6.000000e+00 : f32
    %49 = vector.broadcast %cst_30 : f32 to vector<32x128xf32>
    %50 = arith.maximumf %49, %48 : vector<32x128xf32>
    %51 = vector.broadcast %cst_31 : f32 to vector<32x128xf32>
    %52 = arith.minimumf %51, %50 : vector<32x128xf32>
    %53 = vector.shape_cast %52 : vector<32x128xf32> to vector<2x16x128xf32>
    %c0_32 = arith.constant 0 : index
    %c0_33 = arith.constant 0 : index
    %c0_34 = arith.constant 0 : index
    %54 = vector.load %arg5[%c0_32, %c0_33, %c0_34] : memref<2x16x128xf32, #tpu.memory_space<vmem>>, vector<2x16x128xf32>
    tpu.vector_store %arg5[%c0_32, %c0_33, %c0_34], %53 {strides = array<i32>} : memref<2x16x128xf32, #tpu.memory_space<vmem>>, vector<2x16x128xf32>,
    return
  }
  func.func @transform_0(%arg0: i32) -> (i32, i32, i32) {
    %c0_i32 = arith.constant 0 : i32
    %c0_i32_0 = arith.constant 0 : i32
    %c0_i32_1 = arith.constant 0 : i32
    %c0_i32_2 = arith.constant 0 : i32
    return %c0_i32, %c0_i32_0, %c0_i32_1 : i32, i32, i32
  }
  func.func @transform_1(%arg0: i32) -> (i32, i32) {
    %c0_i32 = arith.constant 0 : i32
    %c0_i32_0 = arith.constant 0 : i32
    %c0_i32_1 = arith.constant 0 : i32
    return %c0_i32, %c0_i32_0 : i32, i32
  }
  func.func @transform_2(%arg0: i32) -> (i32, i32) {
    %c0_i32 = arith.constant 0 : i32
    %c0_i32_0 = arith.constant 0 : i32
    %c0_i32_1 = arith.constant 0 : i32
    return %c0_i32, %c0_i32_0 : i32, i32
  }
  func.func @transform_3(%arg0: i32) -> (i32, i32) {
    %c0_i32 = arith.constant 0 : i32
    %c0_i32_0 = arith.constant 0 : i32
    %c0_i32_1 = arith.constant 0 : i32
    return %c0_i32, %c0_i32_0 : i32, i32
  }
  func.func @transform_4(%arg0: i32) -> (i32, i32, i32) {
    %c0_i32 = arith.constant 0 : i32
    %c0_i32_0 = arith.constant 0 : i32
    %c0_i32_1 = arith.constant 0 : i32
    %c0_i32_2 = arith.constant 0 : i32
    return %c0_i32, %c0_i32_0, %c0_i32_1 : i32, i32, i32
  }
}

</mosaic_0001>

<llo_original>
// kernel: tpu_custom_call.1
$region0: #{tpu_custom_call.1}
  #allocation0 [shape = 'u32[]', space=smem, size = 0x4, offset = 0x4, fixed_abs, tag = 'smem constant byte address 0x4 - core index']
  #allocation1 [shape = 'u32[144,128]{1,0:T(1,128)}', space=vmem, size = 0x12000, scoped, tag = 'internal scratch']
  #allocation2 [shape = 'f32[2,16,384]{2,1,0:T(8,128)}', space=vmem, size = 0xc000, scoped, tag = 'scratch operand']
  %s0 = inlined_call_operand.hbm [shape: f32[2,16,64], index: 0, kind: input, shape index: {}]
  %s1 = inlined_call_operand.hbm [shape: f32[384,128], index: 1, kind: input, shape index: {}]
  %s2 = inlined_call_operand.vmem [shape: f32[1,128], index: 2, kind: input, shape index: {}]
  %s3 = inlined_call_operand.vmem [shape: f32[1,128], index: 3, kind: input, shape index: {}]
  %s4 = inlined_call_operand.hbm [shape: f32[2,16,128], index: 4, kind: output, shape index: {}]
  %s5 = sld [smem:[#allocation0]]
  $region34: #{tpu_custom_call.1} parent=0
    _
  %s7 = ssub.s32 1, %s5
  %s8 = scalar_select 0, %s7, %s5
  $region1: #{tpu_custom_call.1} parent=0
    #allocation3 [shape = 'u8[16384]{0}', space=vmem, size = 0x4000, scoped, tag = 'input window, operand 0, single buffered']
    #allocation4 [shape = 's32[1]{0}', space=sflag, size = 0x4, scoped, tag = 'scoped memory for tpu_custom_call.1']
    #allocation5 [shape = 's32[1]{0}', space=sflag, size = 0x4, scoped, tag = 'scoped memory for tpu_custom_call.1']
    #allocation6 [shape = 'u8[196608]{0}', space=vmem, size = 0x30000, scoped, tag = 'input window, operand 1, single buffered']
    #allocation7 [shape = 's32[1]{0}', space=sflag, size = 0x4, scoped, tag = 'scoped memory for tpu_custom_call.1']
    #allocation8 [shape = 'u8[16384]{0}', space=vmem, size = 0x4000, scoped, tag = 'output window, operand 0, single buffered']
    %9 = vsyncpa [#allocation4], 0
    %10 = vsyncpa [#allocation7], 0
    %11 = vsyncpa [#allocation5], 0
    // Predicated region
    $region2: #{tpu_custom_call.1} parent=1 // pred_check
      _
    $region3: #{tpu_custom_call.1} parent=1 // pred_check_branch
      %13 = sbr.rel (0) target = $region5
    $region4: #{tpu_custom_call.1} parent=1 // pred_region
      %s15 = ssub.s32 512, 512
      %16 = vsyncadd [#allocation4], %s15
      %s17 = sshll.u32 [#allocation3], 4
      %s18 = int_to_ptr.vmem [resolvable:$true] %s17
      %23 = dma.hbm_to_vmem [thread:$0]  %s0, 512, %s18, [#allocation4], 128, 128, 8
    $region5: #{tpu_custom_call.1} parent=1 // pred_fallthru
      _
    // Predicated region
    $region6: #{tpu_custom_call.1} parent=1 // pred_check
      _
    $region7: #{tpu_custom_call.1} parent=1 // pred_check_branch
      %25 = sbr.rel (0) target = $region9
    $region8: #{tpu_custom_call.1} parent=1 // pred_region
      %s27 = ssub.s32 6144, 6144
      %28 = vsyncadd [#allocation7], %s27
      %s29 = sshll.u32 [#allocation6], 4
      %s30 = int_to_ptr.vmem [resolvable:$true] %s29
      %35 = dma.hbm_to_vmem [thread:$0]  %s1, 6144, %s30, [#allocation7], 128, 128, 8
    $region9: #{tpu_custom_call.1} parent=1 // pred_fallthru
      _
    // Predicated region
    $region10: #{tpu_custom_call.1} parent=1 // pred_check
      _
    $region11: #{tpu_custom_call.1} parent=1 // pred_check_branch
      %37 = sbr.rel (0) target = $region13
    $region12: #{tpu_custom_call.1} parent=1 // pred_region
      _
    $region13: #{tpu_custom_call.1} parent=1 // pred_fallthru
      _
    // Predicated region
    $region14: #{tpu_custom_call.1} parent=1 // pred_check
      _
    $region15: #{tpu_custom_call.1} parent=1 // pred_check_branch
      %39 = sbr.rel (0) target = $region17
    $region16: #{tpu_custom_call.1} parent=1 // pred_region
      _
    $region17: #{tpu_custom_call.1} parent=1 // pred_fallthru
      _
    // Predicated region
    $region18: #{tpu_custom_call.1} parent=1 // pred_check
      _
    $region19: #{tpu_custom_call.1} parent=1 // pred_check_branch
      %41 = sbr.rel (0) target = $region21
    $region20: #{tpu_custom_call.1} parent=1 // pred_region
      %42 = dma.done [#allocation4], 512
    $region21: #{tpu_custom_call.1} parent=1 // pred_fallthru
      _
    // Predicated region
    $region22: #{tpu_custom_call.1} parent=1 // pred_check
      _
    $region23: #{tpu_custom_call.1} parent=1 // pred_check_branch
      %44 = sbr.rel (0) target = $region25
    $region24: #{tpu_custom_call.1} parent=1 // pred_region
      %45 = dma.done [#allocation7], 6144
    $region25: #{tpu_custom_call.1} parent=1 // pred_fallthru
      _
    %46 = vst [vmem:[#allocation2] sm:$0xff] 0.0
    %47 = vst [vmem:[#allocation2 + $0x8] sm:$0xff] 0.0
    %48 = vst [vmem:[#allocation2 + $0x10] sm:$0xff] 0.0
    %49 = vst [vmem:[#allocation2 + $0x18] sm:$0xff] 0.0
    %50 = vst [vmem:[#allocation2 + $0x20] sm:$0xff] 0.0
    %51 = vst [vmem:[#allocation2 + $0x28] sm:$0xff] 0.0
    %52 = vst [vmem:[#allocation2 + $0x30] sm:$0xff] 0.0
    %53 = vst [vmem:[#allocation2 + $0x38] sm:$0xff] 0.0
    %54 = vst [vmem:[#allocation2 + $0x40] sm:$0xff] 0.0
    %55 = vst [vmem:[#allocation2 + $0x48] sm:$0xff] 0.0
    %56 = vst [vmem:[#allocation2 + $0x50] sm:$0xff] 0.0
    %57 = vst [vmem:[#allocation2 + $0x58] sm:$0xff] 0.0
    %v58 = vld [vmem:[#allocation3] sm:$0xff]
    %v59 = vld [vmem:[#allocation3 + $0x8] sm:$0xff]
    %v60 = vld [vmem:[#allocation3 + $0x10] sm:$0xff]
    %v61 = vld [vmem:[#allocation3 + $0x18] sm:$0xff]
    %vm66 = vcmask 1040384
    %v67 = vrot.slane %v58, 7
    %v68 = vrot.slane %v59, 7
    %v69 = vsel %vm66, %v67, %v68
    %v70 = vrot.slane %v60, 7
    %v71 = vrot.slane %v61, 7
    %v72 = vsel %vm66, %v70, %v71
    %vm77 = vcmask 523265
    %78 = vst.msk [vmem:[#allocation2] sm:$0xfe] %vm77, %v67
    %vm79 = vcmask 523264
    %80 = vst.msk [vmem:[#allocation2 + $0x18] sm:$0xff] %vm79, %v69
    %81 = vst.msk [vmem:[#allocation2 + $0x30] sm:$0xfe] %vm77, %v70
    %82 = vst.msk [vmem:[#allocation2 + $0x48] sm:$0xff] %vm79, %v72
    %83 = vst.msk [vmem:[#allocation2 + $0x8] sm:$0xff] %vm79, %v58
    %84 = vst.msk [vmem:[#allocation2 + $0x20] sm:$0xff] %vm79, %v59
    %85 = vst.msk [vmem:[#allocation2 + $0x38] sm:$0xff] %vm79, %v60
    %86 = vst.msk [vmem:[#allocation2 + $0x50] sm:$0xff] %vm79, %v61
    %vm87 = vcmask 1046528
    %v88 = vrot.slane %v58, 1
    %v89 = vrot.slane %v59, 1
    %v90 = vsel %vm87, %v88, %v89
    %v91 = vrot.slane %v60, 1
    %v92 = vrot.slane %v61, 1
    %v93 = vsel %vm87, %v91, %v92
    %98 = vst.msk [vmem:[#allocation2 + $0x10] sm:$0xff] %vm79, %v90
    %vm99 = vcmask 522240
    %100 = vst.msk [vmem:[#allocation2 + $0x28] sm:$0x7f] %vm99, %v89
    %101 = vst.msk [vmem:[#allocation2 + $0x40] sm:$0xff] %vm79, %v93
    %102 = vst.msk [vmem:[#allocation2 + $0x58] sm:$0x7f] %vm99, %v92
    %v103 = vld [vmem:[#allocation2] sm:$0xff]
    %v104 = vld [vmem:[#allocation2 + $0x8] sm:$0xff]
    %v105 = vld [vmem:[#allocation2 + $0x10] sm:$0xff]
    %v106 = vld [vmem:[#allocation2 + $0x18] sm:$0xff]
    %v107 = vld [vmem:[#allocation2 + $0x20] sm:$0xff]
    %v108 = vld [vmem:[#allocation2 + $0x28] sm:$0xff]
    %v109 = vld [vmem:[#allocation2 + $0x30] sm:$0xff]
    %v110 = vld [vmem:[#allocation2 + $0x38] sm:$0xff]
    %v111 = vld [vmem:[#allocation2 + $0x40] sm:$0xff]
    %v112 = vld [vmem:[#allocation2 + $0x48] sm:$0xff]
    %v113 = vld [vmem:[#allocation2 + $0x50] sm:$0xff]
    %v114 = vld [vmem:[#allocation2 + $0x58] sm:$0xff]
    %v115 = vld [vmem:[#allocation6] sm:$0xff]
    %v116 = vld [vmem:[#allocation6 + $0x8] sm:$0xff]
    %v117 = vld [vmem:[#allocation6 + $0x10] sm:$0xff]
    %v118 = vld [vmem:[#allocation6 + $0x18] sm:$0xff]
    %v119 = vld [vmem:[#allocation6 + $0x20] sm:$0xff]
    %v120 = vld [vmem:[#allocation6 + $0x28] sm:$0xff]
    %v121 = vld [vmem:[#allocation6 + $0x30] sm:$0xff]
    %v122 = vld [vmem:[#allocation6 + $0x38] sm:$0xff]
    %v123 = vld [vmem:[#allocation6 + $0x40] sm:$0xff]
    %v124 = vld [vmem:[#allocation6 + $0x48] sm:$0xff]
    %v125 = vld [vmem:[#allocation6 + $0x50] sm:$0xff]
    %v126 = vld [vmem:[#allocation6 + $0x58] sm:$0xff]
    %v127 = vld [vmem:[#allocation6 + $0x60] sm:$0xff]
    %v128 = vld [vmem:[#allocation6 + $0x68] sm:$0xff]
    %v129 = vld [vmem:[#allocation6 + $0x70] sm:$0xff]
    %v130 = vld [vmem:[#allocation6 + $0x78] sm:$0xff]
    %v131 = vld [vmem:[#allocation6 + $0x80] sm:$0xff]
    %v132 = vld [vmem:[#allocation6 + $0x88] sm:$0xff]
    %v133 = vld [vmem:[#allocation6 + $0x90] sm:$0xff]
    %v134 = vld [vmem:[#allocation6 + $0x98] sm:$0xff]
    %v135 = vld [vmem:[#allocation6 + $0xa0] sm:$0xff]
    %v136 = vld [vmem:[#allocation6 + $0xa8] sm:$0xff]
    %v137 = vld [vmem:[#allocation6 + $0xb0] sm:$0xff]
    %v138 = vld [vmem:[#allocation6 + $0xb8] sm:$0xff]
    %v139 = vld [vmem:[#allocation6 + $0xc0] sm:$0xff]
    %v140 = vld [vmem:[#allocation6 + $0xc8] sm:$0xff]
    %v141 = vld [vmem:[#allocation6 + $0xd0] sm:$0xff]
    %v142 = vld [vmem:[#allocation6 + $0xd8] sm:$0xff]
    %v143 = vld [vmem:[#allocation6 + $0xe0] sm:$0xff]
    %v144 = vld [vmem:[#allocation6 + $0xe8] sm:$0xff]
    %v145 = vld [vmem:[#allocation6 + $0xf0] sm:$0xff]
    %v146 = vld [vmem:[#allocation6 + $0xf8] sm:$0xff]
    %v147 = vld [vmem:[#allocation6 + $0x100] sm:$0xff]
    %v148 = vld [vmem:[#allocation6 + $0x108] sm:$0xff]
    %v149 = vld [vmem:[#allocation6 + $0x110] sm:$0xff]
    %v150 = vld [vmem:[#allocation6 + $0x118] sm:$0xff]
    %v151 = vld [vmem:[#allocation6 + $0x120] sm:$0xff]
    %v152 = vld [vmem:[#allocation6 + $0x128] sm:$0xff]
    %v153 = vld [vmem:[#allocation6 + $0x130] sm:$0xff]
    %v154 = vld [vmem:[#allocation6 + $0x138] sm:$0xff]
    %v155 = vld [vmem:[#allocation6 + $0x140] sm:$0xff]
    %v156 = vld [vmem:[#allocation6 + $0x148] sm:$0xff]
    %v157 = vld [vmem:[#allocation6 + $0x150] sm:$0xff]
    %v158 = vld [vmem:[#allocation6 + $0x158] sm:$0xff]
    %v159 = vld [vmem:[#allocation6 + $0x160] sm:$0xff]
    %v160 = vld [vmem:[#allocation6 + $0x168] sm:$0xff]
    %v161 = vld [vmem:[#allocation6 + $0x170] sm:$0xff]
    %v162 = vld [vmem:[#allocation6 + $0x178] sm:$0xff]
    %163 = vmatprep.subr.mxu0 0.0
    %164 = vmatpush1.msra.mxu0 %v115
    %165 = vmatprep.subr.mxu0 0.0
    %166 = vmatpush1.msra.mxu0 %v116
    %167 = vmatprep.subr.mxu0 0.0
    %168 = vmatpush1.msra.mxu0 %v117
    %169 = vmatprep.subr.mxu0 0.0
    %170 = vmatpush1.msra.mxu0 %v118
    %171 = vmatprep.subr.mxu0 0.0
    %172 = vmatpush1.msra.mxu0 %v119
    %173 = vmatprep.subr.mxu0 0.0
    %174 = vmatpush1.msra.mxu0 %v120
    %175 = vmatprep.subr.mxu0 0.0
    %176 = vmatpush1.msra.mxu0 %v121
    %177 = vmatprep.subr.mxu0 0.0
    %178 = vmatpush1.msra.mxu0 %v122
    %179 = vmatprep.subr.mxu0 0.0
    %180 = vmatpush1.msra.mxu0 %v123
    %181 = vmatprep.subr.mxu0 0.0
    %182 = vmatpush1.msra.mxu0 %v124
    %183 = vmatprep.subr.mxu0 0.0
    %184 = vmatpush1.msra.mxu0 %v125
    %185 = vmatprep.subr.mxu0 0.0
    %186 = vmatpush1.msra.mxu0 %v126
    %187 = vmatprep.subr.mxu0 0.0
    %188 = vmatpush1.msra.mxu0 %v127
    %189 = vmatprep.subr.mxu0 0.0
    %190 = vmatpush1.msra.mxu0 %v128
    %191 = vmatprep.subr.mxu0 0.0
    %192 = vmatpush1.msra.mxu0 %v129
    %193 = vmatprep.subr.mxu0 0.0
    %194 = vmatpush1.msra.mxu0 %v130
    %195 = vmatprep.subr.mxu0 0.0
    %196 = vmatpush1.msra.mxu0 %v131
    %197 = vmatprep.subr.mxu0 0.0
    %198 = vmatpush1.msra.mxu0 %v132
    %199 = vmatprep.subr.mxu0 0.0
    %200 = vmatpush1.msra.mxu0 %v133
    %201 = vmatprep.subr.mxu0 0.0
    %202 = vmatpush1.msra.mxu0 %v134
    %203 = vmatprep.subr.mxu0 0.0
    %204 = vmatpush1.msra.mxu0 %v135
    %205 = vmatprep.subr.mxu0 0.0
    %206 = vmatpush1.msra.mxu0 %v136
    %207 = vmatprep.subr.mxu0 0.0
    %208 = vmatpush1.msra.mxu0 %v137
    %209 = vmatprep.subr.mxu0 0.0
    %210 = vmatpush1.msra.mxu0 %v138
    %211 = vmatprep.subr.mxu0 0.0
    %212 = vmatpush1.msra.mxu0 %v139
    %213 = vmatprep.subr.mxu0 0.0
    %214 = vmatpush1.msra.mxu0 %v140
    %215 = vmatprep.subr.mxu0 0.0
    %216 = vmatpush1.msra.mxu0 %v141
    %217 = vmatprep.subr.mxu0 0.0
    %218 = vmatpush1.msra.mxu0 %v142
    %219 = vmatprep.subr.mxu0 0.0
    %220 = vmatpush1.msra.mxu0 %v143
    %221 = vmatprep.subr.mxu0 0.0
    %222 = vmatpush1.msra.mxu0 %v144
    %223 = vmatprep.subr.mxu0 0.0
    %224 = vmatpush1.msra.mxu0 %v145
    %225 = vmatprep.subr.mxu0 0.0
    %226 = vmatpush1.msra.mxu0 %v146
    %227 = vmatprep.mubr.f32.mxu0 %v104
    %228 = vmatmul.mubr.f32.gmra.mrb[0].mxu0 %v103
    %v229 = vpop.f32.mrb[0].mxu0
    %v230 = vadd.f32 0.0, %v229
    %v231 = vpop.f32.mrb[0].mxu0
    %232 = vmatprep.mubr.f32.mxu0 %v107
    %233 = vmatmul.mubr.f32.gmra.mrb[0].mxu0 %v106
    %v234 = vpop.f32.mrb[0].mxu0
    %v235 = vadd.f32 0.0, %v234
    %v236 = vpop.f32.mrb[0].mxu0
    %237 = vmatprep.mubr.f32.mxu0 %v110
    %238 = vmatmul.mubr.f32.gmra.mrb[0].mxu0 %v109
    %v239 = vpop.f32.mrb[0].mxu0
    %v240 = vadd.f32 0.0, %v239
    %v241 = vpop.f32.mrb[0].mxu0
    %242 = vmatprep.mubr.f32.mxu0 %v113
    %243 = vmatmul.mubr.f32.gmra.mrb[0].mxu0 %v112
    %v244 = vpop.f32.mrb[0].mxu0
    %v245 = vadd.f32 0.0, %v244
    %v246 = vpop.f32.mrb[0].mxu0
    %247 = vdwg.mxu0
    %248 = vmatprep.subr.mxu0 0.0
    %249 = vmatpush1.msra.mxu0 %v147
    %250 = vmatprep.subr.mxu0 0.0
    %251 = vmatpush1.msra.mxu0 %v148
    %252 = vmatprep.subr.mxu0 0.0
    %253 = vmatpush1.msra.mxu0 %v149
    %254 = vmatprep.subr.mxu0 0.0
    %255 = vmatpush1.msra.mxu0 %v150
    %256 = vmatprep.subr.mxu0 0.0
    %257 = vmatpush1.msra.mxu0 %v151
    %258 = vmatprep.subr.mxu0 0.0
    %259 = vmatpush1.msra.mxu0 %v152
    %260 = vmatprep.subr.mxu0 0.0
    %261 = vmatpush1.msra.mxu0 %v153
    %262 = vmatprep.subr.mxu0 0.0
    %263 = vmatpush1.msra.mxu0 %v154
    %264 = vmatprep.subr.mxu0 0.0
    %265 = vmatpush1.msra.mxu0 %v155
    %266 = vmatprep.subr.mxu0 0.0
    %267 = vmatpush1.msra.mxu0 %v156
    %268 = vmatprep.subr.mxu0 0.0
    %269 = vmatpush1.msra.mxu0 %v157
    %270 = vmatprep.subr.mxu0 0.0
    %271 = vmatpush1.msra.mxu0 %v158
    %272 = vmatprep.subr.mxu0 0.0
    %273 = vmatpush1.msra.mxu0 %v159
    %274 = vmatprep.subr.mxu0 0.0
    %275 = vmatpush1.msra.mxu0 %v160
    %276 = vmatprep.subr.mxu0 0.0
    %277 = vmatpush1.msra.mxu0 %v161
    %278 = vmatprep.subr.mxu0 0.0
    %279 = vmatpush1.msra.mxu0 %v162
    %280 = vmatprep.subr.mxu0 0.0
    %281 = vmatpush1.msra.mxu0 0.0
    %282 = vmatprep.subr.mxu0 0.0
    %283 = vmatpush1.msra.mxu0 0.0
    %284 = vmatprep.subr.mxu0 0.0
    %285 = vmatpush1.msra.mxu0 0.0
    %286 = vmatprep.subr.mxu0 0.0
    %287 = vmatpush1.msra.mxu0 0.0
    %288 = vmatprep.subr.mxu0 0.0
    %289 = vmatpush1.msra.mxu0 0.0
    %290 = vmatprep.subr.mxu0 0.0
    %291 = vmatpush1.msra.mxu0 0.0
    %292 = vmatprep.subr.mxu0 0.0
    %293 = vmatpush1.msra.mxu0 0.0
    %294 = vmatprep.subr.mxu0 0.0
    %295 = vmatpush1.msra.mxu0 0.0
    %296 = vmatprep.subr.mxu0 0.0
    %297 = vmatpush1.msra.mxu0 0.0
    %298 = vmatprep.subr.mxu0 0.0
    %299 = vmatpush1.msra.mxu0 0.0
    %300 = vmatprep.subr.mxu0 0.0
    %301 = vmatpush1.msra.mxu0 0.0
    %302 = vmatprep.subr.mxu0 0.0
    %303 = vmatpush1.msra.mxu0 0.0
    %304 = vmatprep.subr.mxu0 0.0
    %305 = vmatpush1.msra.mxu0 0.0
    %306 = vmatprep.subr.mxu0 0.0
    %307 = vmatpush1.msra.mxu0 0.0
    %308 = vmatprep.subr.mxu0 0.0
    %309 = vmatpush1.msra.mxu0 0.0
    %310 = vmatprep.subr.mxu0 0.0
    %311 = vmatpush1.msra.mxu0 0.0
    %312 = vmatprep.mubr.f32.mxu0 0.0
    %313 = vmatmul.mubr.f32.gmra.mrb[0].mxu0 %v105
    %v314 = vpop.f32.mrb[0].mxu0
    %v315 = vadd.f32 %v230, %v314
    %v316 = vpop.f32.mrb[0].mxu0
    %317 = vmatprep.mubr.f32.mxu0 0.0
    %318 = vmatmul.mubr.f32.gmra.mrb[0].mxu0 %v108
    %v319 = vpop.f32.mrb[0].mxu0
    %v320 = vadd.f32 %v235, %v319
    %v321 = vpop.f32.mrb[0].mxu0
    %322 = vmatprep.mubr.f32.mxu0 0.0
    %323 = vmatmul.mubr.f32.gmra.mrb[0].mxu0 %v111
    %v324 = vpop.f32.mrb[0].mxu0
    %v325 = vadd.f32 %v240, %v324
    %v326 = vpop.f32.mrb[0].mxu0
    %327 = vmatprep.mubr.f32.mxu0 0.0
    %328 = vmatmul.mubr.f32.gmra.mrb[0].mxu0 %v114
    %v329 = vpop.f32.mrb[0].mxu0
    %v330 = vadd.f32 %v245, %v329
    %v331 = vpop.f32.mrb[0].mxu0
    %332 = vdwg.mxu0
    %v333 = vadd.f32 %v315, %v320
    %v334 = vadd.f32 %v333, %v325
    %v335 = vadd.f32 %v334, %v330
    %v336 = vrot.slane %v335, 4
    %v337 = vadd.f32 %v335, %v336
    %v338 = vrot.slane %v337, 2
    %v339 = vadd.f32 %v337, %v338
    %v340 = vrot.slane %v339, 1
    %v341 = vadd.f32 %v339, %v340
    %342 = vrot.lane.b32.xlu0 %v341, 64
    %v343 = vpop.permute.xlu0 %342
    %v344 = vadd.f32 %v341, %v343
    %345 = vrot.lane.b32.xlu0 %v344, 32
    %v346 = vpop.permute.xlu0 %345
    %v347 = vadd.f32 %v344, %v346
    %348 = vrot.lane.b32.xlu0 %v347, 16
    %v349 = vpop.permute.xlu0 %348
    %v350 = vadd.f32 %v347, %v349
    %351 = vrot.lane.b32.xlu0 %v350, 8
    %v352 = vpop.permute.xlu0 %351
    %v353 = vadd.f32 %v350, %v352
    %v354 = vrcp.pop 512.0
    %v355 = vmul.f32 %v353, %v354
    %v356 = vlaneseq
    %v357 = vshrl.u32 %v356, 7
    %v358 = vsub.s32 0, %v357
    %v359 = vrot.slane %v355, %v358
    %v360 = vsub.f32 %v315, %v359
    %v361 = vsub.f32 %v320, %v359
    %v362 = vsub.f32 %v325, %v359
    %v363 = vsub.f32 %v330, %v359
    %v364 = vmul.f32 %v360, %v360
    %v365 = vmul.f32 %v361, %v361
    %v366 = vmul.f32 %v362, %v362
    %v367 = vmul.f32 %v363, %v363
    %v368 = vadd.f32 %v364, %v365
    %v369 = vadd.f32 %v368, %v366
    %v370 = vadd.f32 %v369, %v367
    %v371 = vrot.slane %v370, 4
    %v372 = vadd.f32 %v370, %v371
    %v373 = vrot.slane %v372, 2
    %v374 = vadd.f32 %v372, %v373
    %v375 = vrot.slane %v374, 1
    %v376 = vadd.f32 %v374, %v375
    %377 = vrot.lane.b32.xlu0 %v376, 64
    %v378 = vpop.permute.xlu0 %377
    %v379 = vadd.f32 %v376, %v378
    %380 = vrot.lane.b32.xlu0 %v379, 32
    %v381 = vpop.permute.xlu0 %380
    %v382 = vadd.f32 %v379, %v381
    %383 = vrot.lane.b32.xlu0 %v382, 16
    %v384 = vpop.permute.xlu0 %383
    %v385 = vadd.f32 %v382, %v384
    %386 = vrot.lane.b32.xlu0 %v385, 8
    %v387 = vpop.permute.xlu0 %386
    %v388 = vadd.f32 %v385, %v387
    %v389 = vmul.f32 %v388, %v354
    %v390 = vadd.f32 %v389, 1e-05
    %v391 = vrsqrt.pop %v390
    %v392 = vld [vmem:[%s2] sm:$0x1]
    %v393 = vmul.f32 %v391, %v392
    %v394 = vlaneseq
    %v395 = vshrl.u32 %v394, 7
    %v396 = vsub.s32 0, %v395
    %v397 = vrot.slane %v393, %v396
    %v398 = vmul.f32 %v360, %v397
    %v399 = vmul.f32 %v361, %v397
    %v400 = vmul.f32 %v362, %v397
    %v401 = vmul.f32 %v363, %v397
    %v402 = vld [vmem:[%s3] sm:$0x1]
    %v404 = vlaneseq
    %v405 = vshrl.u32 %v404, 7
    %v406 = vsub.s32 0, %v405
    %v407 = vrot.slane %v402, %v406
    %v409 = vadd.f32 %v398, %v407
    %v410 = vadd.f32 %v399, %v407
    %v411 = vadd.f32 %v400, %v407
    %v412 = vadd.f32 %v401, %v407
    %v413 = vmax.f32 %v409, 0.0
    %v414 = vmax.f32 %v410, 0.0
    %v415 = vmax.f32 %v411, 0.0
    %v416 = vmax.f32 %v412, 0.0
    %v417 = vmin.f32 %v413, 6.0
    %v418 = vmin.f32 %v414, 6.0
    %v419 = vmin.f32 %v415, 6.0
    %v420 = vmin.f32 %v416, 6.0
    %421 = vst [vmem:[#allocation8] sm:$0xff] %v417
    %422 = vst [vmem:[#allocation8 + $0x8] sm:$0xff] %v418
    %423 = vst [vmem:[#allocation8 + $0x10] sm:$0xff] %v419
    %424 = vst [vmem:[#allocation8 + $0x18] sm:$0xff] %v420
    // Predicated region
    $region26: #{tpu_custom_call.1} parent=1 // pred_check
      _
    $region27: #{tpu_custom_call.1} parent=1 // pred_check_branch
      %426 = sbr.rel (0) target = $region29
    $region28: #{tpu_custom_call.1} parent=1 // pred_region
      %s428 = ssub.s32 512, 512
      %429 = vsyncadd [#allocation5], %s428
      %s430 = sshll.u32 [#allocation8], 4
      %s431 = int_to_ptr.vmem [resolvable:$true] %s430
      %436 = dma.vmem_to_hbm [thread:$0]  %s431, 512, %s4, [#allocation5], 128, 128, 8
    $region29: #{tpu_custom_call.1} parent=1 // pred_fallthru
      _
    // Predicated region
    $region30: #{tpu_custom_call.1} parent=1 // pred_check
      _
    $region31: #{tpu_custom_call.1} parent=1 // pred_check_branch
      %438 = sbr.rel (0) target = $region33
    $region32: #{tpu_custom_call.1} parent=1 // pred_region
      %439 = dma.done [#allocation5], 512
    $region33: #{tpu_custom_call.1} parent=1 // pred_fallthru
      _
    %440 = vsyncpa [#allocation4], 1
    %441 = vsyncpa [#allocation7], 1
    %442 = vsyncpa [#allocation5], 1

</llo_original>
